<compile_context>
chip_gen: v7x
topology: tpu7x:2x2x1
jax: 0.10.0
libtpu: 0.0.40
codegen_flags: <defaults>
</compile_context>

<pallas_src>
import functools

import jax
import jax.numpy as jnp
from jax.experimental import pallas as pl
from jax.experimental.pallas import tpu as pltpu


def _sublane_multiple(itemsize):
    # Sublane packing granularity per dtype width (f32: 8, bf16: 16, int8: 32).
    return {1: 32, 2: 16, 4: 8, 8: 8}.get(itemsize, 8)


def _vmem_working_set(tile_n, d, itemsize, num_graphs, reduce_first, n_pks):
    """Rough per-step VMEM footprint for the chosen tiling (bytes)."""
    hs_blocks = 2 * 2 * tile_n * d * itemsize       # 2 hs inputs, double-buffered
    batch_blocks = 2 * tile_n * 4                   # [1,1,T] int32, double-buffered
    f32_staging = 3 * tile_n * d * 4                # diff / sq / masked temporaries
    onehot = num_graphs * tile_n * 4                # [B, T] f32 one-hot
    seg = num_graphs * (1 if reduce_first else d) * 4
    small = 4 * (n_pks + num_graphs) * 4 + 2 * num_graphs * 4
    return hs_blocks + batch_blocks + f32_staging + onehot + seg + small


def _choose_tile_n(n_rows, d, itemsize, num_graphs, reduce_first, n_pks):
    """Pick a node-tile size by bytes-per-block, not a fixed row cap."""
    sub = _sublane_multiple(itemsize)
    # ~3 MiB of HBM traffic per hs input per grid step: big enough to amortize
    # the ~0.35 us per-step overhead, small enough that the full working set
    # (double buffers + f32 staging + one-hot + accumulators) fits every
    # generation once vmem_limit_bytes is raised (v7x: 64 MiB physical).
    target_block_bytes = 3 << 20
    rows = max(sub, target_block_bytes // max(1, d * itemsize))
    rows = max(sub, (rows // sub) * sub)
    n_ceil = -(-n_rows // sub) * sub
    rows = min(rows, max(sub, n_ceil))
    budget = 40 << 20
    while rows > sub and _vmem_working_set(
            rows, d, itemsize, num_graphs, reduce_first, n_pks) > budget:
        rows = max(sub, ((rows // 2) // sub) * sub)
    return rows


def _mtl_kernel(hs_true_ref, hs_pred_ref, hs_batch_ref,
                pks_true_ref, pks_pred_ref, pks_batch_ref,
                pI_true_ref, pI_pred_ref,
                inv_cnt_hs_ref, inv_cnt_pks_ref,
                out_ref, seg_acc,
                *, num_graphs, d_hs, n_rows, tile_n,
                single_reduction, batch_reduction, reduce_first):
    f32 = jnp.float32
    B = num_graphs
    i = pl.program_id(0)
    last = pl.num_programs(0) - 1

    # [B, 1] sublane iota of graph ids, shared by hs / pks one-hot construction.
    graph_ids = jax.lax.broadcasted_iota(jnp.int32, (B, 1), 0)

    @pl.when(i == 0)
    def _init():
        seg_acc[...] = jnp.zeros_like(seg_acc)

    # ---- hs branch (tiled over nodes) ----
    d = hs_pred_ref[...].astype(f32) - hs_true_ref[...].astype(f32)      # [T, D]
    sq = d * d                                                           # [T, D]

    # Mask the ragged tail of the last block: select (not multiply), so
    # garbage / NaN / Inf in the undefined out-of-bounds rows cannot leak.
    row_idx = jax.lax.broadcasted_iota(jnp.int32, (tile_n, 1), 0)        # [T, 1]
    valid = (i * tile_n + row_idx) < n_rows                              # [T, 1]

    batch_lane = hs_batch_ref[0]                                         # [1, T] int32
    onehot_t = (batch_lane == graph_ids).astype(f32)                     # [B, T]

    if reduce_first:
        # Large B: reduce the feature axis first (XLU), then a tiny
        # onehot[B,T] @ s[T,1] MXU matvec -> compute independent of B*D_hs.
        s = jnp.sum(jnp.where(valid, sq, 0.0), axis=-1, keepdims=True)   # [T, 1]
        seg_acc[...] += jnp.dot(onehot_t, s, preferred_element_type=f32)  # [B, 1]
    else:
        # Small B: segment-sum over the node axis on the otherwise-idle MXU.
        sq_m = jnp.where(valid, sq, 0.0)                                 # [T, D]
        seg_acc[...] += jnp.dot(onehot_t, sq_m,
                                preferred_element_type=f32)              # [B, D]

    @pl.when(i == last)
    def _finalize():
        if reduce_first:
            seg_b = seg_acc[...]                                         # [B, 1]
        else:
            seg_b = jnp.sum(seg_acc[...], axis=-1, keepdims=True)        # [B, 1]

        if single_reduction == "mean":
            # mean over feature dim = sum * (1/D); scatter_mean = * exact
            # inverse count (precomputed in the wrapper, clamp-at-1 semantics).
            loss_hs = seg_b * (1.0 / d_hs) * inv_cnt_hs_ref[...]
        else:
            loss_hs = seg_b                                              # sum + scatter_add

        # pks branch: small, lane-dense [1, N_pks] vectors, done once.
        dp = pks_pred_ref[...].astype(f32) - pks_true_ref[...].astype(f32)  # [1, Np]
        sqp = dp * dp
        oh_p = (pks_batch_ref[...] == graph_ids).astype(f32)                # [B, Np]
        seg_p = jnp.sum(oh_p * sqp, axis=-1, keepdims=True)                 # [B, 1]
        if single_reduction == "mean":
            loss_pks = seg_p * inv_cnt_pks_ref[...]
        else:
            loss_pks = seg_p

        # pI branch: one scalar per graph, lane-dense [1, B].
        dpi = pI_pred_ref[...].astype(f32) - pI_true_ref[...].astype(f32)    # [1, B]
        loss_pI = dpi * dpi

        scale = (1.0 / B) if batch_reduction == "mean" else 1.0
        # Write the three task losses directly (no concat) to the SMEM output.
        out_ref[0] = jnp.sum(loss_hs) * scale
        out_ref[1] = jnp.sum(loss_pks) * scale
        out_ref[2] = jnp.sum(loss_pI) * scale


def multitask_loss(y_hs_true, y_hs_pred, y_hs_batch,
                   y_pks_true, y_pks_pred, y_pks_batch,
                   y_pI_true, y_pI_pred,
                   *, num_graphs, single_reduction="mean", batch_reduction="mean",
                   tile_n=None, reduce_first=None):
    assert single_reduction in ("sum", "mean")
    assert batch_reduction in ("sum", "mean")

    N_hs, D_hs = y_hs_true.shape
    N_pks = y_pks_true.shape[0]
    B = num_graphs
    itemsize = jnp.dtype(y_hs_true.dtype).itemsize

    if reduce_first is None:
        # Above ~a few dozen graphs the f32 one-hot matmul would make the
        # kernel MXU-bound; switch to the reduce-features-first path.
        reduce_first = B > 32

    sub = _sublane_multiple(itemsize)
    if tile_n is None:
        tile_n = _choose_tile_n(N_hs, D_hs, itemsize, B, reduce_first, N_pks)
    tile_n = max(sub, (tile_n // sub) * sub)

    num_tiles = (N_hs + tile_n - 1) // tile_n
    n_pad = num_tiles * tile_n

    # Big hs tensors stay untouched in HBM (no jnp.pad, no dtype upcast); only
    # the tiny int32 batch-id vector is padded.  Padded ids == B fail the
    # one-hot compare; the undefined float tail of the ragged last block is
    # masked inside the kernel.
    hs_batch = y_hs_batch.astype(jnp.int32)
    if n_pad != N_hs:
        hs_batch = jnp.pad(hs_batch, (0, n_pad - N_hs), constant_values=B)
    hs_batch3 = hs_batch.reshape(num_tiles, 1, tile_n)       # lane-dense batch ids

    # Exact per-graph inverse counts (torch_scatter clamp-at-1 semantics),
    # computed once from the tiny int32 batch vectors — keeps the count work
    # and the reciprocal out of the kernel's hot loop.
    cnt_hs = jnp.zeros((B,), jnp.float32).at[y_hs_batch].add(1.0)
    cnt_pks = jnp.zeros((B,), jnp.float32).at[y_pks_batch].add(1.0)
    inv_cnt_hs = (1.0 / jnp.maximum(cnt_hs, 1.0)).reshape(B, 1)
    inv_cnt_pks = (1.0 / jnp.maximum(cnt_pks, 1.0)).reshape(B, 1)

    # Lane-dense [1, N] layouts for the small per-sample / per-graph vectors.
    pks_true = y_pks_true.reshape(1, N_pks)
    pks_pred = y_pks_pred.reshape(1, N_pks)
    pks_batch = y_pks_batch.reshape(1, N_pks).astype(jnp.int32)
    pI_true = y_pI_true.reshape(1, B)
    pI_pred = y_pI_pred.reshape(1, B)

    ws = _vmem_working_set(tile_n, D_hs, itemsize, B, reduce_first, N_pks)
    vmem_limit = int(min(max(ws * 5 // 4 + (8 << 20), 32 << 20), 56 << 20))

    kernel = functools.partial(_mtl_kernel,
                               num_graphs=B,
                               d_hs=D_hs,
                               n_rows=N_hs,
                               tile_n=tile_n,
                               single_reduction=single_reduction,
                               batch_reduction=batch_reduction,
                               reduce_first=reduce_first)

    out = pl.pallas_call(
        kernel,
        grid=(num_tiles,),
        in_specs=[
            pl.BlockSpec((tile_n, D_hs), lambda i: (i, 0)),
            pl.BlockSpec((tile_n, D_hs), lambda i: (i, 0)),
            pl.BlockSpec((1, 1, tile_n), lambda i: (i, 0, 0)),
            pl.BlockSpec((1, N_pks), lambda i: (0, 0)),
            pl.BlockSpec((1, N_pks), lambda i: (0, 0)),
            pl.BlockSpec((1, N_pks), lambda i: (0, 0)),
            pl.BlockSpec((1, B), lambda i: (0, 0)),
            pl.BlockSpec((1, B), lambda i: (0, 0)),
            pl.BlockSpec((B, 1), lambda i: (0, 0)),
            pl.BlockSpec((B, 1), lambda i: (0, 0)),
        ],
        out_specs=pl.BlockSpec(memory_space=pltpu.MemorySpace.SMEM),
        out_shape=jax.ShapeDtypeStruct((3,), jnp.float32),
        scratch_shapes=[
            pltpu.VMEM((B, 1 if reduce_first else D_hs), jnp.float32),
        ],
        compiler_params=pltpu.CompilerParams(
            dimension_semantics=("arbitrary",),   # node axis is a reduction axis
            vmem_limit_bytes=vmem_limit),
    )(y_hs_true, y_hs_pred, hs_batch3,
      pks_true, pks_pred, pks_batch, pI_true, pI_pred,
      inv_cnt_hs, inv_cnt_pks)

    return out, jnp.zeros((1,), jnp.float32), jnp.zeros((1,), jnp.float32)


def _reference(y_hs_true, y_hs_pred, y_hs_batch,
               y_pks_true, y_pks_pred, y_pks_batch,
               y_pI_true, y_pI_pred, *, num_graphs,
               single_reduction="mean", batch_reduction="mean"):
    B = num_graphs
    f32 = jnp.float32
    sq_hs = (y_hs_pred.astype(f32) - y_hs_true.astype(f32)) ** 2
    per_node = sq_hs.mean(-1) if single_reduction == "mean" else sq_hs.sum(-1)
    seg = jnp.zeros((B,), f32).at[y_hs_batch].add(per_node)
    if single_reduction == "mean":
        cnt = jnp.zeros((B,), f32).at[y_hs_batch].add(1.0)
        loss_hs = seg / jnp.maximum(cnt, 1.0)       # torch_scatter scatter_mean semantics
    else:
        loss_hs = seg
    sq_pks = (y_pks_pred.astype(f32) - y_pks_true.astype(f32)) ** 2
    seg_p = jnp.zeros((B,), f32).at[y_pks_batch].add(sq_pks)
    if single_reduction == "mean":
        cnt_p = jnp.zeros((B,), f32).at[y_pks_batch].add(1.0)
        loss_pks = seg_p / jnp.maximum(cnt_p, 1.0)
    else:
        loss_pks = seg_p
    loss_pI = (y_pI_pred.astype(f32) - y_pI_true.astype(f32)) ** 2
    stacked = jnp.stack([loss_hs, loss_pks, loss_pI], axis=-1)   # [B, 3]
    return stacked.mean(0) if batch_reduction == "mean" else stacked.sum(0)


if __name__ == "__main__":
    key = jax.random.PRNGKey(0)
    ks = jax.random.split(key, 12)
    ok = True

    # --- Case 1: tiny single-tile problem, both reduction modes (MXU full path)
    B, N_hs, D_hs, N_pks = 2, 8, 32, 8
    y_hs_true = jax.random.normal(ks[0], (N_hs, D_hs), jnp.float32)
    y_hs_pred = jax.random.normal(ks[1], (N_hs, D_hs), jnp.float32)
    y_hs_batch = jnp.array([0, 0, 0, 0, 1, 1, 1, 1], jnp.int32)

    y_pks_true = jax.random.normal(ks[2], (N_pks,), jnp.float32)
    y_pks_pred = jax.random.normal(ks[3], (N_pks,), jnp.float32)
    y_pks_batch = jnp.array([0, 0, 0, 1, 1, 1, 1, 1], jnp.int32)

    y_pI_true = jax.random.normal(ks[4], (B,), jnp.float32)
    y_pI_pred = jax.random.normal(ks[5], (B,), jnp.float32)

    for sred, bred in (("mean", "mean"), ("sum", "sum")):
        mtl, z0, z1 = multitask_loss(
            y_hs_true, y_hs_pred, y_hs_batch,
            y_pks_true, y_pks_pred, y_pks_batch,
            y_pI_true, y_pI_pred,
            num_graphs=B, single_reduction=sred, batch_reduction=bred)
        jax.block_until_ready(mtl)
        ref = _reference(
            y_hs_true, y_hs_pred, y_hs_batch,
            y_pks_true, y_pks_pred, y_pks_batch,
            y_pI_true, y_pI_pred,
            num_graphs=B, single_reduction=sred, batch_reduction=bred)
        assert mtl.shape == (3,) and z0.shape == (1,) and z1.shape == (1,)
        ok &= bool(jnp.allclose(mtl, ref, atol=1e-4, rtol=5e-3))

    # --- Case 2: ragged last tile (N_hs=20, tile_n=8 -> 3 grid steps, 4 masked
    # rows), exercising both segment-sum paths (full MXU and reduce-first).
    N_hs2 = 20
    y_hs_true2 = jax.random.normal(ks[6], (N_hs2, D_hs), jnp.float32)
    y_hs_pred2 = jax.random.normal(ks[7], (N_hs2, D_hs), jnp.float32)
    y_hs_batch2 = jnp.array([0] * 9 + [1] * 11, jnp.int32)
    ref2 = _reference(
        y_hs_true2, y_hs_pred2, y_hs_batch2,
        y_pks_true, y_pks_pred, y_pks_batch,
        y_pI_true, y_pI_pred,
        num_graphs=B, single_reduction="mean", batch_reduction="mean")
    for rf in (False, True):
        mtl2, _, _ = multitask_loss(
            y_hs_true2, y_hs_pred2, y_hs_batch2,
            y_pks_true, y_pks_pred, y_pks_batch,
            y_pI_true, y_pI_pred,
            num_graphs=B, single_reduction="mean", batch_reduction="mean",
            tile_n=8, reduce_first=rf)
        jax.block_until_ready(mtl2)
        ok &= bool(jnp.allclose(mtl2, ref2, atol=1e-4, rtol=5e-3))

    # --- Case 3: bf16 hs inputs stay bf16 in HBM (widened per tile in VMEM),
    # auto tile size, single ragged block, 3 graphs.
    B3, N_hs3 = 3, 40
    hs_true3 = jax.random.normal(ks[8], (N_hs3, D_hs), jnp.float32).astype(jnp.bfloat16)
    hs_pred3 = jax.random.normal(ks[9], (N_hs3, D_hs), jnp.float32).astype(jnp.bfloat16)
    hs_batch3 = jnp.sort(jax.random.randint(ks[10], (N_hs3,), 0, B3)).astype(jnp.int32)
    pI_true3 = jax.random.normal(ks[11], (B3,), jnp.float32)
    pI_pred3 = jax.random.normal(ks[11], (B3,), jnp.float32) + 0.5
    mtl3, _, _ = multitask_loss(
        hs_true3, hs_pred3, hs_batch3,
        y_pks_true, y_pks_pred, y_pks_batch,
        pI_true3, pI_pred3,
        num_graphs=B3, single_reduction="mean", batch_reduction="mean")
    jax.block_until_ready(mtl3)
    ref3 = _reference(
        hs_true3, hs_pred3, hs_batch3,
        y_pks_true, y_pks_pred, y_pks_batch,
        pI_true3, pI_pred3,
        num_graphs=B3, single_reduction="mean", batch_reduction="mean")
    ok &= bool(jnp.allclose(mtl3, ref3, atol=1e-4, rtol=5e-3))

    assert ok
    print("KERNEL_OK")
</pallas_src>

<mosaic_0001>
module attributes {stable_mosaic.version = 11 : i64} {
  func.func @_mtl_kernel(%arg0: i32, %arg1: memref<8x32xf32, #tpu.memory_space<vmem>>, %arg2: memref<8x32xf32, #tpu.memory_space<vmem>>, %arg3: memref<1x1x8xi32, #tpu.memory_space<vmem>>, %arg4: memref<1x8xf32, #tpu.memory_space<vmem>>, %arg5: memref<1x8xf32, #tpu.memory_space<vmem>>, %arg6: memref<1x8xi32, #tpu.memory_space<vmem>>, %arg7: memref<1x2xf32, #tpu.memory_space<vmem>>, %arg8: memref<1x2xf32, #tpu.memory_space<vmem>>, %arg9: memref<2x1xf32, #tpu.memory_space<vmem>>, %arg10: memref<2x1xf32, #tpu.memory_space<vmem>>, %arg11: memref<3xf32, #tpu.memory_space<smem>>, %arg12: memref<2x32xf32, #tpu.memory_space<vmem>>) attributes {dimension_semantics = [#tpu.dimension_semantics<arbitrary>], iteration_bounds = array<i64: 1>, scalar_prefetch = 0 : i64, scratch_operands = 1 : i64, tpu.core_type = #tpu.core_type<tc>, window_params = [{transform_indices = @transform_0, window_bounds = array<i64: 8, 32>}, {transform_indices = @transform_1, window_bounds = array<i64: 8, 32>}, {transform_indices = @transform_2, window_bounds = array<i64: 1, 1, 8>}, {pipeline_mode = #tpu.pipeline_mode<synchronous>, transform_indices = @transform_3, window_bounds = array<i64: 1, 8>}, {pipeline_mode = #tpu.pipeline_mode<synchronous>, transform_indices = @transform_4, window_bounds = array<i64: 1, 8>}, {pipeline_mode = #tpu.pipeline_mode<synchronous>, transform_indices = @transform_5, window_bounds = array<i64: 1, 8>}, {pipeline_mode = #tpu.pipeline_mode<synchronous>, transform_indices = @transform_6, window_bounds = array<i64: 1, 2>}, {pipeline_mode = #tpu.pipeline_mode<synchronous>, transform_indices = @transform_7, window_bounds = array<i64: 1, 2>}, {pipeline_mode = #tpu.pipeline_mode<synchronous>, transform_indices = @transform_8, window_bounds = array<i64: 2, 1>}, {pipeline_mode = #tpu.pipeline_mode<synchronous>, transform_indices = @transform_9, window_bounds = array<i64: 2, 1>}, {transform_indices = @transform_10, window_bounds = array<i64: 3>}]} {
    %0 = tpu.iota {dimensions = array<i32: 0>} : vector<2x1xi32>
    %c0_i32 = arith.constant 0 : i32
    %1 = arith.cmpi eq, %arg0, %c0_i32 : i32
    %2 = arith.extui %1 : i1 to i32
    %c0_i32_0 = arith.constant 0 : i32
    %3 = arith.cmpi ne, %2, %c0_i32_0 : i32
    scf.if %3 {
      %cst_15 = arith.constant 0.000000e+00 : f32
      %32 = vector.broadcast %cst_15 : f32 to vector<2x32xf32>
      %c0_16 = arith.constant 0 : index
      %c0_17 = arith.constant 0 : index
      %33 = vector.load %arg12[%c0_16, %c0_17] : memref<2x32xf32, #tpu.memory_space<vmem>>, vector<2x32xf32>
      tpu.vector_store %arg12[%c0_16, %c0_17], %32 {strides = array<i32>} : memref<2x32xf32, #tpu.memory_space<vmem>>, vector<2x32xf32>,
    } else {
    }
    %c0 = arith.constant 0 : index
    %c0_1 = arith.constant 0 : index
    %4 = vector.load %arg2[%c0, %c0_1] : memref<8x32xf32, #tpu.memory_space<vmem>>, vector<8x32xf32>
    %c0_2 = arith.constant 0 : index
    %c0_3 = arith.constant 0 : index
    %5 = vector.load %arg1[%c0_2, %c0_3] : memref<8x32xf32, #tpu.memory_space<vmem>>, vector<8x32xf32>
    %6 = arith.subf %4, %5 : vector<8x32xf32>
    %7 = arith.mulf %6, %6 : vector<8x32xf32>
    %8 = tpu.iota {dimensions = array<i32: 0>} : vector<8x1xi32>
    %c8_i32 = arith.constant 8 : i32
    %9 = arith.muli %arg0, %c8_i32 : i32
    %10 = vector.broadcast %9 : i32 to vector<8x1xi32>
    %11 = arith.addi %10, %8 : vector<8x1xi32>
    %c8_i32_4 = arith.constant 8 : i32
    %12 = vector.broadcast %c8_i32_4 : i32 to vector<8x1xi32>
    %13 = arith.cmpi slt, %11, %12 : vector<8x1xi32>
    %c0_5 = arith.constant 0 : index
    %c0_6 = arith.constant 0 : index
    %c0_7 = arith.constant 0 : index
    %14 = vector.load %arg3[%c0_5, %c0_6, %c0_7] : memref<1x1x8xi32, #tpu.memory_space<vmem>>, vector<1x1x8xi32>
    %15 = vector.shape_cast %14 : vector<1x1x8xi32> to vector<1x8xi32>
    %16 = vector.broadcast %15 : vector<1x8xi32> to vector<2x8xi32>
    %17 = vector.broadcast %0 : vector<2x1xi32> to vector<2x8xi32>
    %18 = arith.cmpi eq, %16, %17 : vector<2x8xi32>
    %19 = arith.extui %18 : vector<2x8xi1> to vector<2x8xi32>
    %20 = arith.sitofp %19 : vector<2x8xi32> to vector<2x8xf32>
    %cst = arith.constant 0.000000e+00 : f32
    %21 = vector.shape_cast %13 : vector<8x1xi1> to vector<8x1xi1>
    %22 = vector.broadcast %21 : vector<8x1xi1> to vector<8x32xi1>
    %23 = vector.broadcast %cst : f32 to vector<8x32xf32>
    %24 = arith.select %22, %7, %23 : vector<8x32xi1>, vector<8x32xf32>
    %c0_8 = arith.constant 0 : index
    %c0_9 = arith.constant 0 : index
    %25 = vector.load %arg12[%c0_8, %c0_9] : memref<2x32xf32, #tpu.memory_space<vmem>>, vector<2x32xf32>
    %cst_10 = arith.constant dense<0.000000e+00> : vector<2x32xf32>
    %26 = tpu.matmul %20, %24, %cst_10 {dimension_numbers = #tpu.dot_dimension_numbers<[1], [0], [0], [1], [0, 0, 1, 1], [], []>} : vector<2x8xf32>, vector<8x32xf32>, vector<2x32xf32> -> vector<2x32xf32>
    %27 = arith.addf %25, %26 : vector<2x32xf32>
    %c0_11 = arith.constant 0 : index
    %c0_12 = arith.constant 0 : index
    %28 = vector.load %arg12[%c0_11, %c0_12] : memref<2x32xf32, #tpu.memory_space<vmem>>, vector<2x32xf32>
    tpu.vector_store %arg12[%c0_11, %c0_12], %27 {strides = array<i32>} : memref<2x32xf32, #tpu.memory_space<vmem>>, vector<2x32xf32>,
    %c0_i32_13 = arith.constant 0 : i32
    %29 = arith.cmpi eq, %arg0, %c0_i32_13 : i32
    %30 = arith.extui %29 : i1 to i32
    %c0_i32_14 = arith.constant 0 : i32
    %31 = arith.cmpi ne, %30, %c0_i32_14 : i32
    scf.if %31 {
      %c0_15 = arith.constant 0 : index
      %c0_16 = arith.constant 0 : index
      %32 = vector.load %arg12[%c0_15, %c0_16] : memref<2x32xf32, #tpu.memory_space<vmem>>, vector<2x32xf32>
      %cst_17 = arith.constant dense<0.000000e+00> : vector<2xf32>
      %33 = vector.multi_reduction <add>, %32, %cst_17 [1] : vector<2x32xf32> to vector<2xf32>
      %34 = vector.shape_cast %33 : vector<2xf32> to vector<2x1xf32>
      %cst_18 = arith.constant 3.125000e-02 : f32
      %35 = vector.broadcast %cst_18 : f32 to vector<2x1xf32>
      %36 = arith.mulf %34, %35 : vector<2x1xf32>
      %c0_19 = arith.constant 0 : index
      %c0_20 = arith.constant 0 : index
      %37 = vector.load %arg9[%c0_19, %c0_20] : memref<2x1xf32, #tpu.memory_space<vmem>>, vector<2x1xf32>
      %38 = arith.mulf %36, %37 : vector<2x1xf32>
      %c0_21 = arith.constant 0 : index
      %c0_22 = arith.constant 0 : index
      %39 = vector.load %arg5[%c0_21, %c0_22] : memref<1x8xf32, #tpu.memory_space<vmem>>, vector<1x8xf32>
      %c0_23 = arith.constant 0 : index
      %c0_24 = arith.constant 0 : index
      %40 = vector.load %arg4[%c0_23, %c0_24] : memref<1x8xf32, #tpu.memory_space<vmem>>, vector<1x8xf32>
      %41 = arith.subf %39, %40 : vector<1x8xf32>
      %42 = arith.mulf %41, %41 : vector<1x8xf32>
      %c0_25 = arith.constant 0 : index
      %c0_26 = arith.constant 0 : index
      %43 = vector.load %arg6[%c0_25, %c0_26] : memref<1x8xi32, #tpu.memory_space<vmem>>, vector<1x8xi32>
      %44 = vector.broadcast %43 : vector<1x8xi32> to vector<2x8xi32>
      %45 = vector.broadcast %0 : vector<2x1xi32> to vector<2x8xi32>
      %46 = arith.cmpi eq, %44, %45 : vector<2x8xi32>
      %47 = arith.extui %46 : vector<2x8xi1> to vector<2x8xi32>
      %48 = arith.sitofp %47 : vector<2x8xi32> to vector<2x8xf32>
      %49 = vector.broadcast %42 : vector<1x8xf32> to vector<2x8xf32>
      %50 = arith.mulf %48, %49 : vector<2x8xf32>
      %cst_27 = arith.constant dense<0.000000e+00> : vector<2xf32>
      %51 = vector.multi_reduction <add>, %50, %cst_27 [1] : vector<2x8xf32> to vector<2xf32>
      %52 = vector.shape_cast %51 : vector<2xf32> to vector<2x1xf32>
      %c0_28 = arith.constant 0 : index
      %c0_29 = arith.constant 0 : index
      %53 = vector.load %arg10[%c0_28, %c0_29] : memref<2x1xf32, #tpu.memory_space<vmem>>, vector<2x1xf32>
      %54 = arith.mulf %52, %53 : vector<2x1xf32>
      %c0_30 = arith.constant 0 : index
      %c0_31 = arith.constant 0 : index
      %55 = vector.load %arg8[%c0_30, %c0_31] : memref<1x2xf32, #tpu.memory_space<vmem>>, vector<1x2xf32>
      %c0_32 = arith.constant 0 : index
      %c0_33 = arith.constant 0 : index
      %56 = vector.load %arg7[%c0_32, %c0_33] : memref<1x2xf32, #tpu.memory_space<vmem>>, vector<1x2xf32>
      %57 = arith.subf %55, %56 : vector<1x2xf32>
      %58 = arith.mulf %57, %57 : vector<1x2xf32>
      %59 = vector.shape_cast %38 : vector<2x1xf32> to vector<1x2x1xf32>
      %cst_34 = arith.constant dense<0.000000e+00> : vector<1xf32>
      %60 = vector.multi_reduction <add>, %59, %cst_34 [1, 2] : vector<1x2x1xf32> to vector<1xf32>
      %61 = vector.shape_cast %60 : vector<1xf32> to vector<1x1x1xf32>
      %62 = vector.extract %61[0, 0, 0] : f32 from vector<1x1x1xf32>
      %cst_35 = arith.constant 5.000000e-01 : f32
      %63 = arith.mulf %62, %cst_35 : f32
      %c0_36 = arith.constant 0 : index
      %64 = memref.load %arg11[%c0_36] : memref<3xf32, #tpu.memory_space<smem>>
      memref.store %63, %arg11[%c0_36] : memref<3xf32, #tpu.memory_space<smem>>
      %65 = vector.shape_cast %54 : vector<2x1xf32> to vector<1x2x1xf32>
      %cst_37 = arith.constant dense<0.000000e+00> : vector<1xf32>
      %66 = vector.multi_reduction <add>, %65, %cst_37 [1, 2] : vector<1x2x1xf32> to vector<1xf32>
      %67 = vector.shape_cast %66 : vector<1xf32> to vector<1x1x1xf32>
      %68 = vector.extract %67[0, 0, 0] : f32 from vector<1x1x1xf32>
      %cst_38 = arith.constant 5.000000e-01 : f32
      %69 = arith.mulf %68, %cst_38 : f32
      %c1 = arith.constant 1 : index
      %70 = memref.load %arg11[%c1] : memref<3xf32, #tpu.memory_space<smem>>
      memref.store %69, %arg11[%c1] : memref<3xf32, #tpu.memory_space<smem>>
      %71 = vector.shape_cast %58 : vector<1x2xf32> to vector<1x1x2xf32>
      %cst_39 = arith.constant dense<0.000000e+00> : vector<1xf32>
      %72 = vector.multi_reduction <add>, %71, %cst_39 [1, 2] : vector<1x1x2xf32> to vector<1xf32>
      %73 = vector.shape_cast %72 : vector<1xf32> to vector<1x1x1xf32>
      %74 = vector.extract %73[0, 0, 0] : f32 from vector<1x1x1xf32>
      %cst_40 = arith.constant 5.000000e-01 : f32
      %75 = arith.mulf %74, %cst_40 : f32
      %c2 = arith.constant 2 : index
      %76 = memref.load %arg11[%c2] : memref<3xf32, #tpu.memory_space<smem>>
      memref.store %75, %arg11[%c2] : memref<3xf32, #tpu.memory_space<smem>>
    } else {
    }
    return
  }
  func.func @transform_0(%arg0: i32) -> (i32, i32) {
    %c0_i32 = arith.constant 0 : i32
    %c0_i32_0 = arith.constant 0 : i32
    return %arg0, %c0_i32 : i32, i32
  }
  func.func @transform_1(%arg0: i32) -> (i32, i32) {
    %c0_i32 = arith.constant 0 : i32
    %c0_i32_0 = arith.constant 0 : i32
    return %arg0, %c0_i32 : i32, i32
  }
  func.func @transform_2(%arg0: i32) -> (i32, i32, i32) {
    %c0_i32 = arith.constant 0 : i32
    %c0_i32_0 = arith.constant 0 : i32
    %c0_i32_1 = arith.constant 0 : i32
    return %arg0, %c0_i32, %c0_i32_0 : i32, i32, i32
  }
  func.func @transform_3(%arg0: i32) -> (i32, i32) {
    %c0_i32 = arith.constant 0 : i32
    %c0_i32_0 = arith.constant 0 : i32
    %c0_i32_1 = arith.constant 0 : i32
    return %c0_i32, %c0_i32_0 : i32, i32
  }
  func.func @transform_4(%arg0: i32) -> (i32, i32) {
    %c0_i32 = arith.constant 0 : i32
    %c0_i32_0 = arith.constant 0 : i32
    %c0_i32_1 = arith.constant 0 : i32
    return %c0_i32, %c0_i32_0 : i32, i32
  }
  func.func @transform_5(%arg0: i32) -> (i32, i32) {
    %c0_i32 = arith.constant 0 : i32
    %c0_i32_0 = arith.constant 0 : i32
    %c0_i32_1 = arith.constant 0 : i32
    return %c0_i32, %c0_i32_0 : i32, i32
  }
  func.func @transform_6(%arg0: i32) -> (i32, i32) {
    %c0_i32 = arith.constant 0 : i32
    %c0_i32_0 = arith.constant 0 : i32
    %c0_i32_1 = arith.constant 0 : i32
    return %c0_i32, %c0_i32_0 : i32, i32
  }
  func.func @transform_7(%arg0: i32) -> (i32, i32) {
    %c0_i32 = arith.constant 0 : i32
    %c0_i32_0 = arith.constant 0 : i32
    %c0_i32_1 = arith.constant 0 : i32
    return %c0_i32, %c0_i32_0 : i32, i32
  }
  func.func @transform_8(%arg0: i32) -> (i32, i32) {
    %c0_i32 = arith.constant 0 : i32
    %c0_i32_0 = arith.constant 0 : i32
    %c0_i32_1 = arith.constant 0 : i32
    return %c0_i32, %c0_i32_0 : i32, i32
  }
  func.func @transform_9(%arg0: i32) -> (i32, i32) {
    %c0_i32 = arith.constant 0 : i32
    %c0_i32_0 = arith.constant 0 : i32
    %c0_i32_1 = arith.constant 0 : i32
    return %c0_i32, %c0_i32_0 : i32, i32
  }
  func.func @transform_10(%arg0: i32) -> i32 {
    %c0_i32 = arith.constant 0 : i32
    %c0_i32_0 = arith.constant 0 : i32
    return %c0_i32 : i32
  }
}

</mosaic_0001>

<llo_original>
// kernel: tpu_custom_call.1
$region0: #{tpu_custom_call.1}
  #allocation0 [shape = 'u32[]', space=smem, size = 0x4, offset = 0x4, fixed_abs, tag = 'smem constant byte address 0x4 - core index']
  #allocation1 [shape = 'u32[144,128]{1,0:T(1,128)}', space=vmem, size = 0x12000, scoped, tag = 'internal scratch']
  #allocation2 [shape = 'f32[2,32]{1,0:T(2,128)}', space=vmem, size = 0x400, scoped, tag = 'scratch operand']
  %s0 = inlined_call_operand.hbm [shape: f32[8,32], index: 0, kind: input, shape index: {}]
  %s1 = inlined_call_operand.vmem [shape: f32[8,32], index: 1, kind: input, shape index: {}]
  %s2 = inlined_call_operand.vmem [shape: s32[1,1,8], index: 2, kind: input, shape index: {}]
  %s3 = inlined_call_operand.vmem [shape: f32[1,8], index: 3, kind: input, shape index: {}]
  %s4 = inlined_call_operand.vmem [shape: f32[1,8], index: 4, kind: input, shape index: {}]
  %s5 = inlined_call_operand.vmem [shape: s32[1,8], index: 5, kind: input, shape index: {}]
  %s6 = inlined_call_operand.vmem [shape: f32[1,2], index: 6, kind: input, shape index: {}]
  %s7 = inlined_call_operand.vmem [shape: f32[1,2], index: 7, kind: input, shape index: {}]
  %s8 = inlined_call_operand.vmem [shape: f32[2,1], index: 8, kind: input, shape index: {}]
  %s9 = inlined_call_operand.vmem [shape: f32[2,1], index: 9, kind: input, shape index: {}]
  %s10 = inlined_call_operand.hbm [shape: f32[3], index: 10, kind: output, shape index: {}]
  %s11 = sld [smem:[#allocation0]]
  $region62: #{tpu_custom_call.1} parent=0
    _
  %s13 = ssub.s32 1, %s11
  %s14 = scalar_select 0, %s13, %s11
  $region1: #{tpu_custom_call.1} parent=0
    #allocation3 [shape = 'u8[4096]{0}', space=vmem, size = 0x1000, scoped, tag = 'input window, operand 0, single buffered']
    #allocation4 [shape = 's32[1]{0}', space=sflag, size = 0x4, scoped, tag = 'scoped memory for tpu_custom_call.1']
    #allocation5 [shape = 's32[1]{0}', space=sflag, size = 0x4, scoped, tag = 'scoped memory for tpu_custom_call.1']
    #allocation6 [shape = 'u8[512]{0}', space=smem, size = 0x200, scoped, tag = 'output window, operand 0, single buffered']
    %15 = vsyncpa [#allocation4], 0
    %16 = vsyncpa [#allocation5], 0
    // Predicated region
    $region2: #{tpu_custom_call.1} parent=1 // pred_check
      _
    $region3: #{tpu_custom_call.1} parent=1 // pred_check_branch
      %18 = sbr.rel (0) target = $region5
    $region4: #{tpu_custom_call.1} parent=1 // pred_region
      %s20 = ssub.s32 128, 128
      %21 = vsyncadd [#allocation4], %s20
      %s23 = sshll.u32 [#allocation3], 4
      %s24 = int_to_ptr.vmem [resolvable:$true] %s23
      %26 = dma.hbm_to_vmem [thread:$0]  %s0, 128, %s24, [#allocation4]
    $region5: #{tpu_custom_call.1} parent=1 // pred_fallthru
      _
    // Predicated region
    $region6: #{tpu_custom_call.1} parent=1 // pred_check
      _
    $region7: #{tpu_custom_call.1} parent=1 // pred_check_branch
      %28 = sbr.rel (0) target = $region9
    $region8: #{tpu_custom_call.1} parent=1 // pred_region
      _
    $region9: #{tpu_custom_call.1} parent=1 // pred_fallthru
      _
    // Predicated region
    $region10: #{tpu_custom_call.1} parent=1 // pred_check
      _
    $region11: #{tpu_custom_call.1} parent=1 // pred_check_branch
      %30 = sbr.rel (0) target = $region13
    $region12: #{tpu_custom_call.1} parent=1 // pred_region
      _
    $region13: #{tpu_custom_call.1} parent=1 // pred_fallthru
      _
    // Predicated region
    $region14: #{tpu_custom_call.1} parent=1 // pred_check
      _
    $region15: #{tpu_custom_call.1} parent=1 // pred_check_branch
      %32 = sbr.rel (0) target = $region17
    $region16: #{tpu_custom_call.1} parent=1 // pred_region
      _
    $region17: #{tpu_custom_call.1} parent=1 // pred_fallthru
      _
    // Predicated region
    $region18: #{tpu_custom_call.1} parent=1 // pred_check
      _
    $region19: #{tpu_custom_call.1} parent=1 // pred_check_branch
      %34 = sbr.rel (0) target = $region21
    $region20: #{tpu_custom_call.1} parent=1 // pred_region
      _
    $region21: #{tpu_custom_call.1} parent=1 // pred_fallthru
      _
    // Predicated region
    $region22: #{tpu_custom_call.1} parent=1 // pred_check
      _
    $region23: #{tpu_custom_call.1} parent=1 // pred_check_branch
      %36 = sbr.rel (0) target = $region25
    $region24: #{tpu_custom_call.1} parent=1 // pred_region
      _
    $region25: #{tpu_custom_call.1} parent=1 // pred_fallthru
      _
    // Predicated region
    $region26: #{tpu_custom_call.1} parent=1 // pred_check
      _
    $region27: #{tpu_custom_call.1} parent=1 // pred_check_branch
      %38 = sbr.rel (0) target = $region29
    $region28: #{tpu_custom_call.1} parent=1 // pred_region
      _
    $region29: #{tpu_custom_call.1} parent=1 // pred_fallthru
      _
    // Predicated region
    $region30: #{tpu_custom_call.1} parent=1 // pred_check
      _
    $region31: #{tpu_custom_call.1} parent=1 // pred_check_branch
      %40 = sbr.rel (0) target = $region33
    $region32: #{tpu_custom_call.1} parent=1 // pred_region
      _
    $region33: #{tpu_custom_call.1} parent=1 // pred_fallthru
      _
    // Predicated region
    $region34: #{tpu_custom_call.1} parent=1 // pred_check
      _
    $region35: #{tpu_custom_call.1} parent=1 // pred_check_branch
      %42 = sbr.rel (0) target = $region37
    $region36: #{tpu_custom_call.1} parent=1 // pred_region
      _
    $region37: #{tpu_custom_call.1} parent=1 // pred_fallthru
      _
    // Predicated region
    $region38: #{tpu_custom_call.1} parent=1 // pred_check
      _
    $region39: #{tpu_custom_call.1} parent=1 // pred_check_branch
      %44 = sbr.rel (0) target = $region41
    $region40: #{tpu_custom_call.1} parent=1 // pred_region
      _
    $region41: #{tpu_custom_call.1} parent=1 // pred_fallthru
      _
    // Predicated region
    $region42: #{tpu_custom_call.1} parent=1 // pred_check
      _
    $region43: #{tpu_custom_call.1} parent=1 // pred_check_branch
      %46 = sbr.rel (0) target = $region45
    $region44: #{tpu_custom_call.1} parent=1 // pred_region
      %47 = dma.done [#allocation4], 128
    $region45: #{tpu_custom_call.1} parent=1 // pred_fallthru
      _
    %v48 = vlaneseq
    %v49 = vshrl.u32 %v48, 7
    %p50 = scmp.eq.s32.totalorder 0, 0
    // Predicated region
    $region46: #{tpu_custom_call.1} parent=1 // pred_check
      %p51 = pneg %p50
    $region47: #{tpu_custom_call.1} parent=1 // pred_check_branch
      %53 = sbr.rel (%p51) target = $region49
    $region48: #{tpu_custom_call.1} parent=1 // pred_region
      %vm54 = vcmask 254976
      %55 = vst.msk [vmem:[#allocation2] sm:$0x3] %vm54, 0.0
    $region49: #{tpu_custom_call.1} parent=1 // pred_fallthru
      _
    %v56 = vld [vmem:[%s1] sm:$0xff]
    %v57 = vld [vmem:[#allocation3] sm:$0xff]
    %v58 = vsub.f32 %v56, %v57
    %v59 = vmul.f32 %v58, %v58
    %s60 = smul.u32 0, 8
    %v61 = vstv %s60
    %v62 = vadd.s32 %v61, %v49
    %vm63 = vcmp.lt.s32.totalorder %v62, 8
    %v64 = vld [vmem:[%s2] sm:$0x1]
    %v65 = vlaneseq
    %v66 = vshrl.u32 %v65, 7
    %v67 = vsub.s32 0, %v66
    %v68 = vrot.slane %v64, %v67
    %vm69 = vcmp.eq.s32.totalorder %v68, %v49
    %v70 = vsel %vm69, 1, 0
    %v71 = vcvt.s32.f32 %v70
    %v72 = vsel %vm63, 1, 0
    %vm73 = vcmp.eq.s32.totalorder %v72, 1
    %v74 = vsel %vm73, %v59, 0.0
    %v75 = vld [vmem:[#allocation2] sm:$0x3]
    %vm76 = vcmask 64512
    %v78 = vsel %vm76, %v71, 0
    %80 = vmatprep.subr.mxu0 0.0
    %81 = vmatpush1.msra.mxu0 %v74
    %82 = vmatprep.subr.mxu0 0.0
    %83 = vmatpush1.msra.mxu0 0.0
    %84 = vmatprep.subr.mxu0 0.0
    %85 = vmatpush1.msra.mxu0 0.0
    %86 = vmatprep.subr.mxu0 0.0
    %87 = vmatpush1.msra.mxu0 0.0
    %88 = vmatprep.subr.mxu0 0.0
    %89 = vmatpush1.msra.mxu0 0.0
    %90 = vmatprep.subr.mxu0 0.0
    %91 = vmatpush1.msra.mxu0 0.0
    %92 = vmatprep.subr.mxu0 0.0
    %93 = vmatpush1.msra.mxu0 0.0
    %94 = vmatprep.subr.mxu0 0.0
    %95 = vmatpush1.msra.mxu0 0.0
    %96 = vmatprep.subr.mxu0 0.0
    %97 = vmatpush1.msra.mxu0 0.0
    %98 = vmatprep.subr.mxu0 0.0
    %99 = vmatpush1.msra.mxu0 0.0
    %100 = vmatprep.subr.mxu0 0.0
    %101 = vmatpush1.msra.mxu0 0.0
    %102 = vmatprep.subr.mxu0 0.0
    %103 = vmatpush1.msra.mxu0 0.0
    %104 = vmatprep.subr.mxu0 0.0
    %105 = vmatpush1.msra.mxu0 0.0
    %106 = vmatprep.subr.mxu0 0.0
    %107 = vmatpush1.msra.mxu0 0.0
    %108 = vmatprep.subr.mxu0 0.0
    %109 = vmatpush1.msra.mxu0 0.0
    %110 = vmatprep.subr.mxu0 0.0
    %111 = vmatpush1.msra.mxu0 0.0
    %112 = vmatprep.subr.mxu0 0.0
    %113 = vmatpush1.msra.mxu0 0.0
    %114 = vmatprep.subr.mxu0 0.0
    %115 = vmatpush1.msra.mxu0 0.0
    %116 = vmatprep.subr.mxu0 0.0
    %117 = vmatpush1.msra.mxu0 0.0
    %118 = vmatprep.subr.mxu0 0.0
    %119 = vmatpush1.msra.mxu0 0.0
    %120 = vmatprep.subr.mxu0 0.0
    %121 = vmatpush1.msra.mxu0 0.0
    %122 = vmatprep.subr.mxu0 0.0
    %123 = vmatpush1.msra.mxu0 0.0
    %124 = vmatprep.subr.mxu0 0.0
    %125 = vmatpush1.msra.mxu0 0.0
    %126 = vmatprep.subr.mxu0 0.0
    %127 = vmatpush1.msra.mxu0 0.0
    %128 = vmatprep.subr.mxu0 0.0
    %129 = vmatpush1.msra.mxu0 0.0
    %130 = vmatprep.subr.mxu0 0.0
    %131 = vmatpush1.msra.mxu0 0.0
    %132 = vmatprep.subr.mxu0 0.0
    %133 = vmatpush1.msra.mxu0 0.0
    %134 = vmatprep.subr.mxu0 0.0
    %135 = vmatpush1.msra.mxu0 0.0
    %136 = vmatprep.subr.mxu0 0.0
    %137 = vmatpush1.msra.mxu0 0.0
    %138 = vmatprep.subr.mxu0 0.0
    %139 = vmatpush1.msra.mxu0 0.0
    %140 = vmatprep.subr.mxu0 0.0
    %141 = vmatpush1.msra.mxu0 0.0
    %142 = vmatprep.subr.mxu0 0.0
    %143 = vmatpush1.msra.mxu0 0.0
    %144 = vmatprep.mubr.f32.mxu0 0.0
    %145 = vmatmul.mubr.f32.gmra.mrb[0].mxu0 %v78
    %v146 = vpop.f32.mrb[0].mxu0
    %v147 = vadd.f32 0.0, %v146
    %v148 = vpop.f32.mrb[0].mxu0
    %149 = vdwg.mxu0
    %v150 = vadd.f32 %v75, %v147
    %vm151 = vcmask 254976
    %152 = vst.msk [vmem:[#allocation2] sm:$0x3] %vm151, %v150
    // Predicated region
    $region50: #{tpu_custom_call.1} parent=1 // pred_check
      %p153 = pneg %p50
    $region51: #{tpu_custom_call.1} parent=1 // pred_check_branch
      %155 = sbr.rel (%p153) target = $region53
    $region52: #{tpu_custom_call.1} parent=1 // pred_region
      %v156 = vld [vmem:[#allocation2] sm:$0x3]
      %v157 = vsel %vm151, %v156, 0.0
      %158 = vadd.xlane.f32.xlu0 %v157
      %v159 = vpop.xlane.xlu0 %158
      %v160 = vmul.f32 %v159, 0.03125
      %v161 = vld [vmem:[%s8] sm:$0x3]
      %v162 = vmul.f32 %v160, %v161
      %v163 = vld [vmem:[%s4] sm:$0x1]
      %v164 = vld [vmem:[%s3] sm:$0x1]
      %v165 = vsub.f32 %v163, %v164
      %v166 = vmul.f32 %v165, %v165
      %v167 = vld [vmem:[%s5] sm:$0x1]
      %v168 = vlaneseq
      %v169 = vshrl.u32 %v168, 7
      %v170 = vsub.s32 0, %v169
      %v171 = vrot.slane %v167, %v170
      %vm172 = vcmp.eq.s32.totalorder %v171, %v49
      %v173 = vsel %vm172, 1, 0
      %v174 = vcvt.s32.f32 %v173
      %v176 = vlaneseq
      %v177 = vshrl.u32 %v176, 7
      %v178 = vsub.s32 0, %v177
      %v179 = vrot.slane %v166, %v178
      %v181 = vmul.f32 %v174, %v179
      %vm182 = vcmask 58368
      %v183 = vsel %vm182, %v181, 0.0
      %184 = vadd.xlane.f32.xlu0 %v183
      %v185 = vpop.xlane.xlu0 %184
      %v186 = vld [vmem:[%s9] sm:$0x3]
      %v187 = vmul.f32 %v185, %v186
      %v188 = vld [vmem:[%s7] sm:$0x1]
      %v189 = vld [vmem:[%s6] sm:$0x1]
      %v190 = vsub.f32 %v188, %v189
      %v191 = vmul.f32 %v190, %v190
      %vm192 = vcmask 1024
      %v193 = vsel %vm192, %v162, 0.0
      %194 = vadd.xlane.f32.xlu0 %v193
      %v195 = vpop.xlane.xlu0 %194
      %v196 = vrot.slane %v195, 4
      %v197 = vadd.f32 %v195, %v196
      %v198 = vrot.slane %v197, 2
      %v199 = vadd.f32 %v197, %v198
      %v200 = vrot.slane %v199, 1
      %v201 = vadd.f32 %v199, %v200
      %s202 = vtos %v201
      %s203 = smul.f32 %s202, 0.5
      %s204 = scalar_lea.smem [#allocation6], 0
      %205 = sst [smem:[%s204]] %s203
      %v206 = vsel %vm192, %v187, 0.0
      %207 = vadd.xlane.f32.xlu0 %v206
      %v208 = vpop.xlane.xlu0 %207
      %v209 = vrot.slane %v208, 4
      %v210 = vadd.f32 %v208, %v209
      %v211 = vrot.slane %v210, 2
      %v212 = vadd.f32 %v210, %v211
      %v213 = vrot.slane %v212, 1
      %v214 = vadd.f32 %v212, %v213
      %s215 = vtos %v214
      %s216 = smul.f32 %s215, 0.5
      %s217 = scalar_lea.smem [#allocation6], 1
      %218 = sst [smem:[%s217]] %s216
      %vm219 = vcmask 8192
      %v220 = vsel %vm219, %v191, 0.0
      %221 = vadd.xlane.f32.xlu0 %v220
      %v222 = vpop.xlane.xlu0 %221
      %v223 = vrot.slane %v222, 4
      %v224 = vadd.f32 %v222, %v223
      %v225 = vrot.slane %v224, 2
      %v226 = vadd.f32 %v224, %v225
      %v227 = vrot.slane %v226, 1
      %v228 = vadd.f32 %v226, %v227
      %s229 = vtos %v228
      %s230 = smul.f32 %s229, 0.5
      %s231 = scalar_lea.smem [#allocation6], 2
      %232 = sst [smem:[%s231]] %s230
    $region53: #{tpu_custom_call.1} parent=1 // pred_fallthru
      _
    // Predicated region
    $region54: #{tpu_custom_call.1} parent=1 // pred_check
      _
    $region55: #{tpu_custom_call.1} parent=1 // pred_check_branch
      %234 = sbr.rel (0) target = $region57
    $region56: #{tpu_custom_call.1} parent=1 // pred_region
      %s236 = ssub.s32 16, 16
      %237 = vsyncadd [#allocation5], %s236
      %240 = dma.smem_to_hbm [#allocation6], 16, %s10, [#allocation5]
    $region57: #{tpu_custom_call.1} parent=1 // pred_fallthru
      _
    // Predicated region
    $region58: #{tpu_custom_call.1} parent=1 // pred_check
      _
    $region59: #{tpu_custom_call.1} parent=1 // pred_check_branch
      %242 = sbr.rel (0) target = $region61
    $region60: #{tpu_custom_call.1} parent=1 // pred_region
      %243 = dma.done [#allocation5], 16
    $region61: #{tpu_custom_call.1} parent=1 // pred_fallthru
      _
    %244 = sfence
    %245 = vsyncpa [#allocation4], 1
    %246 = vsyncpa [#allocation5], 1

</llo_original>
